<compile_context>
chip_gen: v5e
topology: v5e:2x2
jax: 0.10.0
libtpu: 0.0.40
codegen_flags: <defaults>
</compile_context>

<pallas_src>
import functools

import jax
import jax.numpy as jnp
from jax.experimental import pallas as pl
from jax.experimental.pallas import tpu as pltpu

LANE = 128          # lane width
ROW_ALIGN = 32      # int8 sublane tile -> label blocks need rows % 32 == 0
PARTIAL_ROWS = 8    # f32 sublane tile -> shape of the per-tile partial sum


def _focal_loss_kernel(x_ref, y_ref, alpha_ref, out_ref, *, gamma, num_classes):
    # x_ref: (1, c, R, 128) logits; y_ref: (1, R, 128) int8 labels;
    # alpha_ref: (c,) f32 in SMEM; out_ref: (1, 1, 8, 128) partial sums.
    y = y_ref[0].astype(jnp.int32)                                  # (R, 128)
    planes = [x_ref[0, ci].astype(jnp.float32) for ci in range(num_classes)]

    # Softmax max over classes: elementwise VPU maximum between full vregs.
    m = planes[0]
    for ci in range(1, num_classes):
        m = jnp.maximum(m, planes[ci])

    # exp / denom / gather of p and alpha at the label class, plane by plane.
    denom = None
    e_y = None
    a = None
    for ci in range(num_classes):
        e_c = jnp.exp(planes[ci] - m)                               # (R, 128) EUP
        denom = e_c if denom is None else denom + e_c
        sel = y == ci
        alpha_c = alpha_ref[ci]                                     # SMEM scalar
        e_y = jnp.where(sel, e_c, 0.0 if e_y is None else e_y)
        a = jnp.where(sel, alpha_c, 0.0 if a is None else a)

    # Exact divide (keeps the rtol=1e-5 reference check; no approx reciprocal).
    p = e_y / denom                                                 # (R, 128)
    log_p = jnp.log(p + 1e-6)
    one_minus_p = 1.0 - p

    g = float(gamma)
    if g == 0.0:
        w_pow = jnp.ones_like(one_minus_p)
    elif g == 2.0:                                   # common case: one square
        w_pow = one_minus_p * one_minus_p
    elif g == int(g) and 1 <= int(g) <= 8:           # small integer gamma
        w_pow = one_minus_p
        for _ in range(int(g) - 1):
            w_pow = w_pow * one_minus_p
    else:                                            # general gamma
        w_pow = jnp.power(one_minus_p, g)

    # Padded pixels have label -1 -> a == 0 and e_y == 0 -> loss exactly 0.
    loss = -(a * w_pow * log_p)                                     # (R, 128)

    # Reduce the (R,128) loss to one (8,128) vreg-shaped partial with pure VPU
    # adds (R is a multiple of 8), then a single unmasked lane-dense store.
    r = loss.shape[0]
    partial = loss.reshape(r // PARTIAL_ROWS, PARTIAL_ROWS, LANE).sum(axis=0)
    out_ref[...] = partial.reshape(1, 1, PARTIAL_ROWS, LANE)


def _round_up(x, m):
    return ((x + m - 1) // m) * m


def focal_loss(pred_nchw, label_bhw, alpha_vec, gamma, *, max_block_bytes=4 << 20):
    """pred_nchw: (b, c, h, w) float; label_bhw: (b, h, w) int; alpha_vec: (c,)."""
    b, c, h, w = pred_nchw.shape
    hw = h * w
    n = b * hw

    rows_true = pl.cdiv(hw, LANE)

    # Largest row-tile keeping the logits block within max_block_bytes (~4 MiB
    # f32 at c=4 -> 2048 rows = 262144 px/tile), aligned to the int8 tile.
    max_rows = max(ROW_ALIGN,
                   (max_block_bytes // (c * LANE * 4)) // ROW_ALIGN * ROW_ALIGN)
    tile_rows = min(_round_up(rows_true, ROW_ALIGN), max_rows)
    # v7x has 2 TensorCores: expose >= 4 parallel grid steps when shapes allow
    # (harmless on v5e/v6e beyond slightly smaller tiles).
    while b * pl.cdiv(rows_true, tile_rows) < 4 and tile_rows > ROW_ALIGN:
        tile_rows = max(ROW_ALIGN, (tile_rows // 2) // ROW_ALIGN * ROW_ALIGN)

    padded_rows = _round_up(rows_true, tile_rows)
    num_tiles = padded_rows // tile_rows
    padded_hw = padded_rows * LANE

    # Free reshapes (no NCHW->NHWC transpose) + one cheap pad only if needed:
    # logits pad with 0, labels with -1 -> padded pixels contribute zero loss.
    x = pred_nchw.reshape(b, c, hw)
    y = label_bhw.reshape(b, hw)
    if padded_hw != hw:
        x = jnp.pad(x, ((0, 0), (0, 0), (0, padded_hw - hw)))
        y = jnp.pad(y, ((0, 0), (0, padded_hw - hw)), constant_values=-1)
    x = x.reshape(b, c, padded_rows, LANE)
    y = y.reshape(b, padded_rows, LANE).astype(jnp.int8)   # 1 B/px label traffic
    alpha_smem = alpha_vec.reshape(c).astype(jnp.float32)

    kernel = functools.partial(_focal_loss_kernel,
                               gamma=float(gamma), num_classes=c)

    x_block_bytes = c * tile_rows * LANE * 4
    y_block_bytes = tile_rows * LANE
    vmem_limit = int(max(32 << 20, 4 * (x_block_bytes + y_block_bytes)))

    partials = pl.pallas_call(
        kernel,
        out_shape=jax.ShapeDtypeStruct((b, num_tiles, PARTIAL_ROWS, LANE),
                                       jnp.float32),
        grid_spec=pltpu.PrefetchScalarGridSpec(
            num_scalar_prefetch=0,
            grid=(b, num_tiles),
            in_specs=[
                pl.BlockSpec((1, c, tile_rows, LANE),
                             lambda bi, ti: (bi, 0, ti, 0)),      # logits
                pl.BlockSpec((1, tile_rows, LANE),
                             lambda bi, ti: (bi, ti, 0)),         # int8 labels
                pl.BlockSpec(memory_space=pltpu.MemorySpace.SMEM),  # alpha (c,)
            ],
            out_specs=pl.BlockSpec((1, 1, PARTIAL_ROWS, LANE),
                                   lambda bi, ti: (bi, ti, 0, 0)),
        ),
        compiler_params=pltpu.CompilerParams(
            dimension_semantics=("parallel", "parallel"),
            vmem_limit_bytes=vmem_limit,
        ),
    )(x, y, alpha_smem)

    # Tiny final reduction + mean in JAX (partials of padded pixels are 0).
    return jnp.sum(partials) / n


def make_alpha(num_classes, alpha):
    # Mirrors FocalLoss.__init__: ones*alpha, but class 0 gets 1-alpha.
    if alpha is None:
        return jnp.ones((num_classes,), jnp.float32)
    a = jnp.ones((num_classes,), jnp.float32) * alpha
    a = a.at[0].set(1.0 - alpha)
    return a


if __name__ == "__main__":
    num_classes = 4
    alpha = 0.25
    gamma = 2.0

    b, c, h, w = 2, num_classes, 16, 16

    key = jax.random.PRNGKey(0)
    k1, k2 = jax.random.split(key)
    pred = jax.random.normal(k1, (b, c, h, w), dtype=jnp.float32)
    label = jax.random.randint(k2, (b, h, w), 0, num_classes, dtype=jnp.int32)

    alpha_vec = make_alpha(num_classes, alpha)

    out = focal_loss(pred, label, alpha_vec, gamma)
    jax.block_until_ready(out)

    # Pure-JAX reference (same math as the PyTorch forward).
    # NOTE: (1 - p.detach())**gamma — detach only affects grads; forward identical.
    x_ref = jnp.transpose(pred, (0, 2, 3, 1)).reshape(-1, num_classes)
    y_ref = label.reshape(-1)
    p_all = jax.nn.softmax(x_ref, axis=1)
    p = p_all[jnp.arange(p_all.shape[0]), y_ref]
    log_p = jnp.log(p + 1e-6)
    a_g = alpha_vec[y_ref]
    w_g = a_g * (1.0 - p) ** gamma
    ref = jnp.mean(-(w_g * log_p))

    assert jnp.allclose(out, ref, rtol=1e-5, atol=1e-6), (out, ref)
    print("KERNEL_OK")
</pallas_src>

<mosaic_0001>
module attributes {stable_mosaic.version = 11 : i64} {
  func.func @_focal_loss_kernel(%arg0: i32, %arg1: i32, %arg2: memref<1x4x32x128xf32, #tpu.memory_space<vmem>>, %arg3: memref<1x32x128xi8, #tpu.memory_space<vmem>>, %arg4: memref<4xf32, #tpu.memory_space<smem>>, %arg5: memref<1x1x8x128xf32, #tpu.memory_space<vmem>>) attributes {dimension_semantics = [#tpu.dimension_semantics<parallel>, #tpu.dimension_semantics<parallel>], iteration_bounds = array<i64: 2, 1>, scalar_prefetch = 0 : i64, scratch_operands = 0 : i64, tpu.core_type = #tpu.core_type<tc>, window_params = [{transform_indices = @transform_0, window_bounds = array<i64: 1, 4, 32, 128>}, {transform_indices = @transform_1, window_bounds = array<i64: 1, 32, 128>}, {transform_indices = @transform_2, window_bounds = array<i64: 4>}, {transform_indices = @transform_3, window_bounds = array<i64: 1, 1, 8, 128>}]} {
    %c0 = arith.constant 0 : index
    %c0_0 = arith.constant 0 : index
    %c0_1 = arith.constant 0 : index
    %0 = vector.load %arg3[%c0, %c0_0, %c0_1] : memref<1x32x128xi8, #tpu.memory_space<vmem>>, vector<1x32x128xi8>
    %1 = vector.shape_cast %0 : vector<1x32x128xi8> to vector<32x128xi8>
    %2 = arith.extsi %1 : vector<32x128xi8> to vector<32x128xi32>
    %c0_2 = arith.constant 0 : index
    %c0_3 = arith.constant 0 : index
    %c0_4 = arith.constant 0 : index
    %c0_5 = arith.constant 0 : index
    %3 = vector.load %arg2[%c0_2, %c0_3, %c0_4, %c0_5] : memref<1x4x32x128xf32, #tpu.memory_space<vmem>>, vector<1x1x32x128xf32>
    %4 = vector.shape_cast %3 : vector<1x1x32x128xf32> to vector<32x128xf32>
    %c0_6 = arith.constant 0 : index
    %c1 = arith.constant 1 : index
    %c0_7 = arith.constant 0 : index
    %c0_8 = arith.constant 0 : index
    %5 = vector.load %arg2[%c0_6, %c1, %c0_7, %c0_8] : memref<1x4x32x128xf32, #tpu.memory_space<vmem>>, vector<1x1x32x128xf32>
    %6 = vector.shape_cast %5 : vector<1x1x32x128xf32> to vector<32x128xf32>
    %c0_9 = arith.constant 0 : index
    %c2 = arith.constant 2 : index
    %c0_10 = arith.constant 0 : index
    %c0_11 = arith.constant 0 : index
    %7 = vector.load %arg2[%c0_9, %c2, %c0_10, %c0_11] : memref<1x4x32x128xf32, #tpu.memory_space<vmem>>, vector<1x1x32x128xf32>
    %8 = vector.shape_cast %7 : vector<1x1x32x128xf32> to vector<32x128xf32>
    %c0_12 = arith.constant 0 : index
    %c3 = arith.constant 3 : index
    %c0_13 = arith.constant 0 : index
    %c0_14 = arith.constant 0 : index
    %9 = vector.load %arg2[%c0_12, %c3, %c0_13, %c0_14] : memref<1x4x32x128xf32, #tpu.memory_space<vmem>>, vector<1x1x32x128xf32>
    %10 = vector.shape_cast %9 : vector<1x1x32x128xf32> to vector<32x128xf32>
    %11 = arith.maximumf %4, %6 : vector<32x128xf32>
    %12 = arith.maximumf %11, %8 : vector<32x128xf32>
    %13 = arith.maximumf %12, %10 : vector<32x128xf32>
    %14 = arith.subf %4, %13 : vector<32x128xf32>
    %15 = math.exp %14 : vector<32x128xf32>
    %c0_i32 = arith.constant 0 : i32
    %16 = vector.broadcast %c0_i32 : i32 to vector<32x128xi32>
    %17 = arith.cmpi eq, %2, %16 : vector<32x128xi32>
    %c0_15 = arith.constant 0 : index
    %18 = memref.load %arg4[%c0_15] : memref<4xf32, #tpu.memory_space<smem>>
    %cst = arith.constant 0.000000e+00 : f32
    %19 = vector.broadcast %cst : f32 to vector<32x128xf32>
    %20 = arith.select %17, %15, %19 : vector<32x128xi1>, vector<32x128xf32>
    %cst_16 = arith.constant 0.000000e+00 : f32
    %21 = vector.broadcast %18 : f32 to vector<32x128xf32>
    %22 = vector.broadcast %cst_16 : f32 to vector<32x128xf32>
    %23 = arith.select %17, %21, %22 : vector<32x128xi1>, vector<32x128xf32>
    %24 = arith.subf %6, %13 : vector<32x128xf32>
    %25 = math.exp %24 : vector<32x128xf32>
    %26 = arith.addf %15, %25 : vector<32x128xf32>
    %c1_i32 = arith.constant 1 : i32
    %27 = vector.broadcast %c1_i32 : i32 to vector<32x128xi32>
    %28 = arith.cmpi eq, %2, %27 : vector<32x128xi32>
    %c1_17 = arith.constant 1 : index
    %29 = memref.load %arg4[%c1_17] : memref<4xf32, #tpu.memory_space<smem>>
    %30 = arith.select %28, %25, %20 : vector<32x128xi1>, vector<32x128xf32>
    %31 = vector.broadcast %29 : f32 to vector<32x128xf32>
    %32 = arith.select %28, %31, %23 : vector<32x128xi1>, vector<32x128xf32>
    %33 = arith.subf %8, %13 : vector<32x128xf32>
    %34 = math.exp %33 : vector<32x128xf32>
    %35 = arith.addf %26, %34 : vector<32x128xf32>
    %c2_i32 = arith.constant 2 : i32
    %36 = vector.broadcast %c2_i32 : i32 to vector<32x128xi32>
    %37 = arith.cmpi eq, %2, %36 : vector<32x128xi32>
    %c2_18 = arith.constant 2 : index
    %38 = memref.load %arg4[%c2_18] : memref<4xf32, #tpu.memory_space<smem>>
    %39 = arith.select %37, %34, %30 : vector<32x128xi1>, vector<32x128xf32>
    %40 = vector.broadcast %38 : f32 to vector<32x128xf32>
    %41 = arith.select %37, %40, %32 : vector<32x128xi1>, vector<32x128xf32>
    %42 = arith.subf %10, %13 : vector<32x128xf32>
    %43 = math.exp %42 : vector<32x128xf32>
    %44 = arith.addf %35, %43 : vector<32x128xf32>
    %c3_i32 = arith.constant 3 : i32
    %45 = vector.broadcast %c3_i32 : i32 to vector<32x128xi32>
    %46 = arith.cmpi eq, %2, %45 : vector<32x128xi32>
    %c3_19 = arith.constant 3 : index
    %47 = memref.load %arg4[%c3_19] : memref<4xf32, #tpu.memory_space<smem>>
    %48 = arith.select %46, %43, %39 : vector<32x128xi1>, vector<32x128xf32>
    %49 = vector.broadcast %47 : f32 to vector<32x128xf32>
    %50 = arith.select %46, %49, %41 : vector<32x128xi1>, vector<32x128xf32>
    %51 = arith.divf %48, %44 : vector<32x128xf32>
    %cst_20 = arith.constant 9.99999997E-7 : f32
    %52 = vector.broadcast %cst_20 : f32 to vector<32x128xf32>
    %53 = arith.addf %51, %52 : vector<32x128xf32>
    %54 = math.log %53 : vector<32x128xf32>
    %cst_21 = arith.constant 1.000000e+00 : f32
    %55 = vector.broadcast %cst_21 : f32 to vector<32x128xf32>
    %56 = arith.subf %55, %51 : vector<32x128xf32>
    %57 = arith.mulf %56, %56 : vector<32x128xf32>
    %58 = arith.mulf %50, %57 : vector<32x128xf32>
    %59 = arith.mulf %58, %54 : vector<32x128xf32>
    %cst_22 = arith.constant 0.000000e+00 : f32
    %60 = vector.broadcast %cst_22 : f32 to vector<32x128xf32>
    %61 = arith.subf %60, %59 : vector<32x128xf32>
    %62 = vector.shape_cast %61 : vector<32x128xf32> to vector<4x8x128xf32>
    %cst_23 = arith.constant dense<0.000000e+00> : vector<8x128xf32>
    %63 = vector.multi_reduction <add>, %62, %cst_23 [0] : vector<4x8x128xf32> to vector<8x128xf32>
    %64 = vector.shape_cast %63 : vector<8x128xf32> to vector<1x1x8x128xf32>
    %c0_24 = arith.constant 0 : index
    %c0_25 = arith.constant 0 : index
    %c0_26 = arith.constant 0 : index
    %c0_27 = arith.constant 0 : index
    %65 = vector.load %arg5[%c0_24, %c0_25, %c0_26, %c0_27] : memref<1x1x8x128xf32, #tpu.memory_space<vmem>>, vector<1x1x8x128xf32>
    tpu.vector_store %arg5[%c0_24, %c0_25, %c0_26, %c0_27], %64 {strides = array<i32>} : memref<1x1x8x128xf32, #tpu.memory_space<vmem>>, vector<1x1x8x128xf32>,
    return
  }
  func.func @transform_0(%arg0: i32, %arg1: i32) -> (i32, i32, i32, i32) {
    %c0_i32 = arith.constant 0 : i32
    %c0_i32_0 = arith.constant 0 : i32
    %c0_i32_1 = arith.constant 0 : i32
    return %arg0, %c0_i32, %arg1, %c0_i32_0 : i32, i32, i32, i32
  }
  func.func @transform_1(%arg0: i32, %arg1: i32) -> (i32, i32, i32) {
    %c0_i32 = arith.constant 0 : i32
    %c0_i32_0 = arith.constant 0 : i32
    return %arg0, %arg1, %c0_i32 : i32, i32, i32
  }
  func.func @transform_2(%arg0: i32, %arg1: i32) -> i32 {
    %c0_i32 = arith.constant 0 : i32
    %c0_i32_0 = arith.constant 0 : i32
    return %c0_i32 : i32
  }
  func.func @transform_3(%arg0: i32, %arg1: i32) -> (i32, i32, i32, i32) {
    %c0_i32 = arith.constant 0 : i32
    %c0_i32_0 = arith.constant 0 : i32
    %c0_i32_1 = arith.constant 0 : i32
    return %arg0, %arg1, %c0_i32, %c0_i32_0 : i32, i32, i32, i32
  }
}

</mosaic_0001>

<llo_original>
// kernel: tpu_custom_call.1
$region0: #{tpu_custom_call.1}
  #allocation0 [shape = 'u32[]', space=smem, size = 0x4, offset = 0x4, fixed_abs, tag = 'smem constant byte address 0x4 - core index']
  #allocation1 [shape = 'u32[72,128]{1,0:T(1,128)}', space=vmem, size = 0x9000, scoped, tag = 'internal scratch']
  %s0 = inlined_call_operand.hbm [shape: f32[2,4,32,128], index: 0, kind: input, shape index: {}]
  %s1 = inlined_call_operand.hbm [shape: s8[2,32,128], index: 1, kind: input, shape index: {}]
  %s2 = inlined_call_operand.vmem [shape: f32[4], index: 2, kind: input, shape index: {}]
  %s3 = inlined_call_operand.hbm [shape: f32[2,1,8,128], index: 3, kind: output, shape index: {}]
  %s4 = sld [smem:[#allocation0]]
  $region57: #{tpu_custom_call.1} parent=0
    _
  %s6 = ssub.s32 1, %s4
  %s7 = scalar_select 0, %s6, %s4
  $region1: #{tpu_custom_call.1} parent=0
    #allocation2 [shape = 'u8[131072]{0}', space=vmem, size = 0x20000, scoped, tag = 'input window, operand 0']
    #allocation3 [shape = 's32[2]{0}', space=sflag, size = 0x8, scoped, tag = 'scoped memory for tpu_custom_call.1']
    #allocation4 [shape = 's32[2]{0}', space=sflag, size = 0x8, scoped, tag = 'scoped memory for tpu_custom_call.1']
    #allocation5 [shape = 's32[2]{0}', space=sflag, size = 0x8, scoped, tag = 'scoped memory for tpu_custom_call.1']
    #allocation6 [shape = 'u8[8192]{0}', space=vmem, size = 0x2000, scoped, tag = 'input window, operand 1']
    #allocation7 [shape = 's32[2]{0}', space=sflag, size = 0x8, scoped, tag = 'scoped memory for tpu_custom_call.1']
    #allocation8 [shape = 'u8[512]{0}', space=smem, size = 0x200, scoped, tag = 'input window, operand 2, single buffered']
    #allocation9 [shape = 'u8[8192]{0}', space=vmem, size = 0x2000, scoped, tag = 'output window, operand 0']
    %8 = vsyncpa [#allocation3], 0
    %s9 = scalar_lea.sflag [#allocation3], 1
    %10 = vsyncpa %s9, 0
    %11 = vsyncpa [#allocation7], 0
    %s12 = scalar_lea.sflag [#allocation7], 1
    %13 = vsyncpa %s12, 0
    %14 = vsyncpa [#allocation5], 0
    %15 = vsyncpa [#allocation4], 0
    %s16 = scalar_lea.sflag [#allocation4], 1
    %17 = vsyncpa %s16, 0
    loop: start=0, step=1, limit=4
    $region2: #{tpu_custom_call.1} parent=1 // loop_pre_header
      _
    $region3: #{tpu_custom_call.1} parent=1 // loop_header
      %s19 = sphi 0, %s23
      %p20 = scmp.ge.s32.totalorder %s19, 4
      %s26 = sphi 0, %s38
      %s27 = sphi 0, %s34
      %s28 = sphi 0, %s26
      %s29 = sphi 0, %s27
      %s30 = sphi 0, %s28
      %s31 = sphi 0, %s29
      %s43 = sphi 0, %s45
      %s46 = sphi 0, %s43
      %s47 = sphi 0, %s46
      %s63 = sphi 0, %s47
      %s71 = sphi 0, %s73
      %s74 = sphi 0, %s71
      %s75 = sphi 0, %s74
      %s91 = sphi 0, %s75
      %s95 = sphi 0, %s95
      %s97 = sphi 0, %s95
      %s98 = sphi 0, %s97
      %s112 = sphi 0, %s98
      %s120 = sphi 0, %s122
      %s123 = sphi 0, %s120
      %s124 = sphi 0, %s123
      %s140 = sphi 0, %s124
    $region4: #{tpu_custom_call.1} parent=1 // loop_header_branch
      %22 = sbr.rel (%p20) target = $region8
    $region5: #{tpu_custom_call.1} parent=1 // loop_body
      %s24 = ssub.s32 %s19, 1
      %s25 = ssub.s32 %s19, 2
      %s32 = sadd.s32 1, %s27
      %p33 = scmp.ge.s32.totalorder %s32, 1
      %s34 = scalar_select %p33, 0, %s32
      %s35 = sadd.s32 1, %s26
      %s36 = scalar_select %p33, %s35, %s26
      %p37 = scmp.ge.s32.totalorder %s36, 2
      %s38 = scalar_select %p37, 0, %s36
      %s39 = ssub.s32 %s26, %s38
      %s40 = ssub.s32 %s27, %s34
      %s41 = sor.u32 %s39, %s40
      %p42 = scmp.eq.s32.totalorder %s41, 0
      %s44 = sadd.s32 %s43, 1
      %s45 = scalar_select %p42, %s43, %s44
      %p48 = pneg %p42
      %p49 = scmp.eq.s32.totalorder %s19, 1
      %p50 = por %p48, %p49
      %p51 = scmp.ne.s32.totalorder %s43, %s46
      %p52 = scmp.eq.s32.totalorder %s19, 0
      %p53 = por %p51, %p52
      %p54 = scmp.ne.s32.totalorder %s43, %s46
      %p55 = scmp.eq.s32.totalorder %s24, 1
      %p56 = por %p54, %p55
      %p57 = scmp.ne.s32.totalorder %s46, %s47
      %p58 = scmp.eq.s32.totalorder %s24, 0
      %p59 = por %p57, %p58
      %p60 = scmp.ne.s32.totalorder %s46, %s47
      %p61 = scmp.eq.s32.totalorder %s25, 1
      %p62 = por %p60, %p61
      %p64 = scmp.ne.s32.totalorder %s47, %s63
      %p65 = scmp.eq.s32.totalorder %s25, 0
      %p66 = por %p64, %p65
      %s67 = ssub.s32 %s26, %s38
      %s68 = ssub.s32 %s27, %s34
      %s69 = sor.u32 %s67, %s68
      %p70 = scmp.eq.s32.totalorder %s69, 0
      %s72 = sadd.s32 %s71, 1
      %s73 = scalar_select %p70, %s71, %s72
      %p76 = pneg %p70
      %p77 = scmp.eq.s32.totalorder %s19, 1
      %p78 = por %p76, %p77
      %p79 = scmp.ne.s32.totalorder %s71, %s74
      %p80 = scmp.eq.s32.totalorder %s19, 0
      %p81 = por %p79, %p80
      %p82 = scmp.ne.s32.totalorder %s71, %s74
      %p83 = scmp.eq.s32.totalorder %s24, 1
      %p84 = por %p82, %p83
      %p85 = scmp.ne.s32.totalorder %s74, %s75
      %p86 = scmp.eq.s32.totalorder %s24, 0
      %p87 = por %p85, %p86
      %p88 = scmp.ne.s32.totalorder %s74, %s75
      %p89 = scmp.eq.s32.totalorder %s25, 1
      %p90 = por %p88, %p89
      %p92 = scmp.ne.s32.totalorder %s75, %s91
      %p93 = scmp.eq.s32.totalorder %s25, 0
      %p94 = por %p92, %p93
      %s96 = sadd.s32 %s95, 1
      %p99 = scmp.eq.s32.totalorder %s19, 1
      %p100 = scmp.ne.s32.totalorder %s95, %s97
      %p101 = scmp.eq.s32.totalorder %s19, 0
      %p102 = por %p100, %p101
      %p103 = scmp.ne.s32.totalorder %s95, %s97
      %p104 = scmp.eq.s32.totalorder %s24, 1
      %p105 = por %p103, %p104
      %p106 = scmp.ne.s32.totalorder %s97, %s98
      %p107 = scmp.eq.s32.totalorder %s24, 0
      %p108 = por %p106, %p107
      %p109 = scmp.ne.s32.totalorder %s97, %s98
      %p110 = scmp.eq.s32.totalorder %s25, 1
      %p111 = por %p109, %p110
      %p113 = scmp.ne.s32.totalorder %s98, %s112
      %p114 = scmp.eq.s32.totalorder %s25, 0
      %p115 = por %p113, %p114
      %s116 = ssub.s32 %s26, %s38
      %s117 = ssub.s32 %s27, %s34
      %s118 = sor.u32 %s116, %s117
      %p119 = scmp.eq.s32.totalorder %s118, 0
      %s121 = sadd.s32 %s120, 1
      %s122 = scalar_select %p119, %s120, %s121
      %p125 = pneg %p119
      %p126 = scmp.eq.s32.totalorder %s19, 1
      %p127 = por %p125, %p126
      %p128 = scmp.ne.s32.totalorder %s120, %s123
      %p129 = scmp.eq.s32.totalorder %s19, 0
      %p130 = por %p128, %p129
      %p131 = scmp.ne.s32.totalorder %s120, %s123
      %p132 = scmp.eq.s32.totalorder %s24, 1
      %p133 = por %p131, %p132
      %p134 = scmp.ne.s32.totalorder %s123, %s124
      %p135 = scmp.eq.s32.totalorder %s24, 0
      %p136 = por %p134, %p135
      %p137 = scmp.ne.s32.totalorder %s123, %s124
      %p138 = scmp.eq.s32.totalorder %s25, 1
      %p139 = por %p137, %p138
      %p141 = scmp.ne.s32.totalorder %s124, %s140
      %p142 = scmp.eq.s32.totalorder %s25, 0
      %p143 = por %p141, %p142
      %p144 = scmp.le.s32.totalorder 1, %s19
      %p145 = scmp.lt.s32.totalorder %s19, 3
      %p146 = pnand %p144, %p145
      %p147 = pneg %p146
      // Predicated region
      $region9: #{tpu_custom_call.1} parent=5 // pred_check
        _
      $region10: #{tpu_custom_call.1} parent=5 // pred_check_branch
        %149 = sbr.rel (%p146) target = $region12
      $region11: #{tpu_custom_call.1} parent=5 // pred_region
        %s150 = ssub.s32 %s19, 1
        // Predicated region
        $region13: #{tpu_custom_call.1} parent=11 // pred_check
          %p151 = pneg %p108
        $region14: #{tpu_custom_call.1} parent=11 // pred_check_branch
          %153 = sbr.rel (%p151) target = $region16
        $region15: #{tpu_custom_call.1} parent=11 // pred_region
          %155 = vsyncadd [#allocation5], 0
          %s157 = sshll.u32 %s2, 4
          %s158 = int_to_ptr.vmem [resolvable:$true] %s157
          %160 = dma.vmem_to_smem %s158, 16, [#allocation8], [#allocation5]
        $region16: #{tpu_custom_call.1} parent=11 // pred_fallthru
          _
      $region12: #{tpu_custom_call.1} parent=5 // pred_fallthru
        _
      %p161 = scmp.lt.s32.totalorder %s19, 2
      // Predicated region
      $region17: #{tpu_custom_call.1} parent=5 // pred_check
        %p162 = pneg %p161
      $region18: #{tpu_custom_call.1} parent=5 // pred_check_branch
        %164 = sbr.rel (%p162) target = $region20
      $region19: #{tpu_custom_call.1} parent=5 // pred_region
        // Predicated region
        $region21: #{tpu_custom_call.1} parent=19 // pred_check
          %p165 = pneg %p53
        $region22: #{tpu_custom_call.1} parent=19 // pred_check_branch
          %167 = sbr.rel (%p165) target = $region24
        $region23: #{tpu_custom_call.1} parent=19 // pred_region
          %s168 = sand.u32 %s43, 1
          %s169 = scalar_lea.sflag [#allocation3], %s168
          %s170 = sand.u32 %s43, 1
          %s171 = smul.addr %s170, 128
          %s172 = scalar_lea.vmem [#allocation2], %s171
          %s173 = smul.u32 4, %s27
          %175 = vsyncadd %s169, 0
          %s176 = smul.addr %s26, 16
          %s177 = sadd.s32 %s173, %s176
          %s178 = smul.addr %s177, 8
          %s179 = scalar_lea.hbm %s0, %s178
          %s180 = sshll.u32 %s179, 4
          %s181 = int_to_ptr.hbm [resolvable:$true] %s180
          %s182 = sshll.u32 %s172, 4
          %s183 = int_to_ptr.vmem [resolvable:$true] %s182
          %188 = dma.hbm_to_vmem [thread:$0]  %s181, 2048, %s183, %s169, 128, 128, 8
        $region24: #{tpu_custom_call.1} parent=19 // pred_fallthru
          _
        // Predicated region
        $region25: #{tpu_custom_call.1} parent=19 // pred_check
          %p189 = pneg %p81
        $region26: #{tpu_custom_call.1} parent=19 // pred_check_branch
          %191 = sbr.rel (%p189) target = $region28
        $region27: #{tpu_custom_call.1} parent=19 // pred_region
          %s192 = sand.u32 %s71, 1
          %s193 = scalar_lea.sflag [#allocation7], %s192
          %s194 = sand.u32 %s71, 1
          %s195 = smul.addr %s194, 8
          %s196 = scalar_lea.vmem [#allocation6], %s195
          %198 = vsyncadd %s193, 0
          %s199 = sadd.s32 %s27, %s26
          %s200 = smul.addr %s199, 8
          %s201 = scalar_lea.hbm %s1, %s200
          %s203 = sshll.u32 %s201, 4
          %s204 = int_to_ptr.hbm [resolvable:$true] %s203
          %s205 = sshll.u32 %s196, 4
          %s206 = int_to_ptr.vmem [resolvable:$true] %s205
          %208 = dma.hbm_to_vmem [thread:$0]  %s204, 128, %s206, %s193
        $region28: #{tpu_custom_call.1} parent=19 // pred_fallthru
          _
      $region20: #{tpu_custom_call.1} parent=5 // pred_fallthru
        _
      %p209 = scmp.le.s32.totalorder 1, %s19
      %p210 = scmp.lt.s32.totalorder %s19, 3
      %p211 = pnand %p209, %p210
      %p212 = pneg %p211
      // Predicated region
      $region29: #{tpu_custom_call.1} parent=5 // pred_check
        _
      $region30: #{tpu_custom_call.1} parent=5 // pred_check_branch
        %214 = sbr.rel (%p211) target = $region32
      $region31: #{tpu_custom_call.1} parent=5 // pred_region
        %s215 = ssub.s32 %s19, 1
        %s216 = sand.u32 %s46, 1
        %s217 = scalar_lea.sflag [#allocation3], %s216
        %s218 = sand.u32 %s46, 1
        %s219 = smul.addr %s218, 128
        %s220 = scalar_lea.vmem [#allocation2], %s219
        // Predicated region
        $region33: #{tpu_custom_call.1} parent=31 // pred_check
          %p221 = pneg %p59
        $region34: #{tpu_custom_call.1} parent=31 // pred_check_branch
          %223 = sbr.rel (%p221) target = $region36
        $region35: #{tpu_custom_call.1} parent=31 // pred_region
          %225 = dma.done %s217, 2048
        $region36: #{tpu_custom_call.1} parent=31 // pred_fallthru
          _
        %s226 = sand.u32 %s74, 1
        %s227 = scalar_lea.sflag [#allocation7], %s226
        %s228 = sand.u32 %s74, 1
        %s229 = smul.addr %s228, 8
        %s230 = scalar_lea.vmem [#allocation6], %s229
        // Predicated region
        $region37: #{tpu_custom_call.1} parent=31 // pred_check
          %p231 = pneg %p87
        $region38: #{tpu_custom_call.1} parent=31 // pred_check_branch
          %233 = sbr.rel (%p231) target = $region40
        $region39: #{tpu_custom_call.1} parent=31 // pred_region
          %235 = dma.done %s227, 128
        $region40: #{tpu_custom_call.1} parent=31 // pred_fallthru
          _
        // Predicated region
        $region41: #{tpu_custom_call.1} parent=31 // pred_check
          %p236 = pneg %p108
        $region42: #{tpu_custom_call.1} parent=31 // pred_check_branch
          %238 = sbr.rel (%p236) target = $region44
        $region43: #{tpu_custom_call.1} parent=31 // pred_region
          %240 = dma.done [#allocation5], 16
        $region44: #{tpu_custom_call.1} parent=31 // pred_fallthru
          _
        %241 = sfence
        %s242 = sand.u32 %s46, 1
        %s243 = scalar_lea.sflag [#allocation3], %s242
        %s244 = sand.u32 %s46, 1
        %s245 = smul.addr %s244, 128
        %s246 = scalar_lea.vmem [#allocation2], %s245
        %p247 = pneg %p59
        %p248 = pneg %p56
        %s249 = sand.u32 %s74, 1
        %s250 = scalar_lea.sflag [#allocation7], %s249
        %s251 = sand.u32 %s74, 1
        %s252 = smul.addr %s251, 8
        %s253 = scalar_lea.vmem [#allocation6], %s252
        %p254 = pneg %p87
        %p255 = pneg %p84
        %p256 = pneg %p108
        %p257 = pneg %p105
        %p258 = pneg %p136
        %p259 = pneg %p133
        %s260 = sand.u32 %s123, 1
        %s261 = scalar_lea.sflag [#allocation4], %s260
        %s262 = sand.u32 %s123, 1
        %s263 = smul.addr %s262, 8
        %s264 = scalar_lea.vmem [#allocation9], %s263
        %s265 = smul.u32 4, %s29
        %v266 = vld [vmem:[%s230] sm:$0xff]
        %v267 = vunpack.c.0.s8 %v266
        %v268 = vunpack.c.1.s8 %v266
        %v269 = vunpack.c.2.s8 %v266
        %v270 = vunpack.c.3.s8 %v266
        %v271 = vld [vmem:[%s220] sm:$0xff]
        %v272 = vld [vmem:[%s220 + $0x8] sm:$0xff]
        %v273 = vld [vmem:[%s220 + $0x10] sm:$0xff]
        %v274 = vld [vmem:[%s220 + $0x18] sm:$0xff]
        %s275 = scalar_lea.vmem %s220, 32 [#allocation2]
        %v276 = vld [vmem:[%s275] sm:$0xff]
        %v277 = vld [vmem:[%s275 + $0x8] sm:$0xff]
        %v278 = vld [vmem:[%s275 + $0x10] sm:$0xff]
        %v279 = vld [vmem:[%s275 + $0x18] sm:$0xff]
        %s280 = scalar_lea.vmem %s220, 64 [#allocation2]
        %v281 = vld [vmem:[%s280] sm:$0xff]
        %v282 = vld [vmem:[%s280 + $0x8] sm:$0xff]
        %v283 = vld [vmem:[%s280 + $0x10] sm:$0xff]
        %v284 = vld [vmem:[%s280 + $0x18] sm:$0xff]
        %s285 = scalar_lea.vmem %s220, 96 [#allocation2]
        %v286 = vld [vmem:[%s285] sm:$0xff]
        %v287 = vld [vmem:[%s285 + $0x8] sm:$0xff]
        %v288 = vld [vmem:[%s285 + $0x10] sm:$0xff]
        %v289 = vld [vmem:[%s285 + $0x18] sm:$0xff]
        %v290 = vmax.f32 %v271, %v276
        %v291 = vmax.f32 %v272, %v277
        %v292 = vmax.f32 %v273, %v278
        %v293 = vmax.f32 %v274, %v279
        %v294 = vmax.f32 %v290, %v281
        %v295 = vmax.f32 %v291, %v282
        %v296 = vmax.f32 %v292, %v283
        %v297 = vmax.f32 %v293, %v284
        %v298 = vmax.f32 %v294, %v286
        %v299 = vmax.f32 %v295, %v287
        %v300 = vmax.f32 %v296, %v288
        %v301 = vmax.f32 %v297, %v289
        %v302 = vsub.f32 %v271, %v298
        %v303 = vsub.f32 %v272, %v299
        %v304 = vsub.f32 %v273, %v300
        %v305 = vsub.f32 %v274, %v301
        %v306 = vmul.f32 %v302, 1.442695
        %v307 = vpow.pop %v306
        %v308 = vmul.f32 %v303, 1.442695
        %v309 = vpow.pop %v308
        %v310 = vmul.f32 %v304, 1.442695
        %v311 = vpow.pop %v310
        %v312 = vmul.f32 %v305, 1.442695
        %v313 = vpow.pop %v312
        %vm314 = vcmp.eq.s32.totalorder %v267, 0
        %vm315 = vcmp.eq.s32.totalorder %v268, 0
        %vm316 = vcmp.eq.s32.totalorder %v269, 0
        %vm317 = vcmp.eq.s32.totalorder %v270, 0
        %s318 = sld [smem:[#allocation8]]
        %v319 = vsel %vm314, %v307, 0.0
        %v320 = vsel %vm315, %v309, 0.0
        %v321 = vsel %vm316, %v311, 0.0
        %v322 = vsel %vm317, %v313, 0.0
        %v323 = vstv %s318
        %v324 = vsel %vm314, %v323, 0.0
        %v325 = vsel %vm315, %v323, 0.0
        %v326 = vsel %vm316, %v323, 0.0
        %v327 = vsel %vm317, %v323, 0.0
        %v328 = vsub.f32 %v276, %v298
        %v329 = vsub.f32 %v277, %v299
        %v330 = vsub.f32 %v278, %v300
        %v331 = vsub.f32 %v279, %v301
        %v332 = vmul.f32 %v328, 1.442695
        %v333 = vpow.pop %v332
        %v334 = vmul.f32 %v329, 1.442695
        %v335 = vpow.pop %v334
        %v336 = vmul.f32 %v330, 1.442695
        %v337 = vpow.pop %v336
        %v338 = vmul.f32 %v331, 1.442695
        %v339 = vpow.pop %v338
        %v340 = vadd.f32 %v307, %v333
        %v341 = vadd.f32 %v309, %v335
        %v342 = vadd.f32 %v311, %v337
        %v343 = vadd.f32 %v313, %v339
        %vm344 = vcmp.eq.s32.totalorder %v267, 1
        %vm345 = vcmp.eq.s32.totalorder %v268, 1
        %vm346 = vcmp.eq.s32.totalorder %v269, 1
        %vm347 = vcmp.eq.s32.totalorder %v270, 1
        %s348 = sld [smem:[#allocation8 + $0x1]]
        %v349 = vsel %vm344, %v333, %v319
        %v350 = vsel %vm345, %v335, %v320
        %v351 = vsel %vm346, %v337, %v321
        %v352 = vsel %vm347, %v339, %v322
        %v353 = vstv %s348
        %v354 = vsel %vm344, %v353, %v324
        %v355 = vsel %vm345, %v353, %v325
        %v356 = vsel %vm346, %v353, %v326
        %v357 = vsel %vm347, %v353, %v327
        %v358 = vsub.f32 %v281, %v298
        %v359 = vsub.f32 %v282, %v299
        %v360 = vsub.f32 %v283, %v300
        %v361 = vsub.f32 %v284, %v301
        %v362 = vmul.f32 %v358, 1.442695
        %v363 = vpow.pop %v362
        %v364 = vmul.f32 %v359, 1.442695
        %v365 = vpow.pop %v364
        %v366 = vmul.f32 %v360, 1.442695
        %v367 = vpow.pop %v366
        %v368 = vmul.f32 %v361, 1.442695
        %v369 = vpow.pop %v368
        %v370 = vadd.f32 %v340, %v363
        %v371 = vadd.f32 %v341, %v365
        %v372 = vadd.f32 %v342, %v367
        %v373 = vadd.f32 %v343, %v369
        %vm374 = vcmp.eq.s32.totalorder %v267, 2
        %vm375 = vcmp.eq.s32.totalorder %v268, 2
        %vm376 = vcmp.eq.s32.totalorder %v269, 2
        %vm377 = vcmp.eq.s32.totalorder %v270, 2
        %s378 = sld [smem:[#allocation8 + $0x2]]
        %v379 = vsel %vm374, %v363, %v349
        %v380 = vsel %vm375, %v365, %v350
        %v381 = vsel %vm376, %v367, %v351
        %v382 = vsel %vm377, %v369, %v352
        %v383 = vstv %s378
        %v384 = vsel %vm374, %v383, %v354
        %v385 = vsel %vm375, %v383, %v355
        %v386 = vsel %vm376, %v383, %v356
        %v387 = vsel %vm377, %v383, %v357
        %v388 = vsub.f32 %v286, %v298
        %v389 = vsub.f32 %v287, %v299
        %v390 = vsub.f32 %v288, %v300
        %v391 = vsub.f32 %v289, %v301
        %v392 = vmul.f32 %v388, 1.442695
        %v393 = vpow.pop %v392
        %v394 = vmul.f32 %v389, 1.442695
        %v395 = vpow.pop %v394
        %v396 = vmul.f32 %v390, 1.442695
        %v397 = vpow.pop %v396
        %v398 = vmul.f32 %v391, 1.442695
        %v399 = vpow.pop %v398
        %v400 = vadd.f32 %v370, %v393
        %v401 = vadd.f32 %v371, %v395
        %v402 = vadd.f32 %v372, %v397
        %v403 = vadd.f32 %v373, %v399
        %vm404 = vcmp.eq.s32.totalorder %v267, 3
        %vm405 = vcmp.eq.s32.totalorder %v268, 3
        %vm406 = vcmp.eq.s32.totalorder %v269, 3
        %vm407 = vcmp.eq.s32.totalorder %v270, 3
        %s408 = sld [smem:[#allocation8 + $0x3]]
        %v409 = vsel %vm404, %v393, %v379
        %v410 = vsel %vm405, %v395, %v380
        %v411 = vsel %vm406, %v397, %v381
        %v412 = vsel %vm407, %v399, %v382
        %v413 = vstv %s408
        %v414 = vsel %vm404, %v413, %v384
        %v415 = vsel %vm405, %v413, %v385
        %v416 = vsel %vm406, %v413, %v386
        %v417 = vsel %vm407, %v413, %v387
        %v418 = vrcp.pop %v400
        %v419 = vmul.f32 %v400, %v418
        %v420 = vsub.f32 1.0, %v419
        %v421 = vmul.f32 %v418, %v420
        %v422 = vadd.f32 %v418, %v421
        %vm423 = vweird.f32 %v400
        %vm424 = vweird.f32 %v418
        %vm425 = vmor %vm423, %vm424
        %v426 = vsel %vm425, %v418, %v422
        %v427 = vand.u32 2147483647, %v400
        %vm428 = vcmp.eq.f32.partialorder %v427, 8.507059e+37
        %v429 = vand.u32 %v400, 2147483648
        %v430 = vor.u32 1.1754944e-38, %v429
        %v431 = vsel %vm428, %v430, %v426
        %v432 = vmul.f32 %v409, %v431
        %v433 = vrcp.pop %v401
        %v434 = vmul.f32 %v401, %v433
        %v435 = vsub.f32 1.0, %v434
        %v436 = vmul.f32 %v433, %v435
        %v437 = vadd.f32 %v433, %v436
        %vm438 = vweird.f32 %v401
        %vm439 = vweird.f32 %v433
        %vm440 = vmor %vm438, %vm439
        %v441 = vsel %vm440, %v433, %v437
        %v442 = vand.u32 2147483647, %v401
        %vm443 = vcmp.eq.f32.partialorder %v442, 8.507059e+37
        %v444 = vand.u32 %v401, 2147483648
        %v445 = vor.u32 1.1754944e-38, %v444
        %v446 = vsel %vm443, %v445, %v441
        %v447 = vmul.f32 %v410, %v446
        %v448 = vrcp.pop %v402
        %v449 = vmul.f32 %v402, %v448
        %v450 = vsub.f32 1.0, %v449
        %v451 = vmul.f32 %v448, %v450
        %v452 = vadd.f32 %v448, %v451
        %vm453 = vweird.f32 %v402
        %vm454 = vweird.f32 %v448
        %vm455 = vmor %vm453, %vm454
        %v456 = vsel %vm455, %v448, %v452
        %v457 = vand.u32 2147483647, %v402
        %vm458 = vcmp.eq.f32.partialorder %v457, 8.507059e+37
        %v459 = vand.u32 %v402, 2147483648
        %v460 = vor.u32 1.1754944e-38, %v459
        %v461 = vsel %vm458, %v460, %v456
        %v462 = vmul.f32 %v411, %v461
        %v463 = vrcp.pop %v403
        %v464 = vmul.f32 %v403, %v463
        %v465 = vsub.f32 1.0, %v464
        %v466 = vmul.f32 %v463, %v465
        %v467 = vadd.f32 %v463, %v466
        %vm468 = vweird.f32 %v403
        %vm469 = vweird.f32 %v463
        %vm470 = vmor %vm468, %vm469
        %v471 = vsel %vm470, %v463, %v467
        %v472 = vand.u32 2147483647, %v403
        %vm473 = vcmp.eq.f32.partialorder %v472, 8.507059e+37
        %v474 = vand.u32 %v403, 2147483648
        %v475 = vor.u32 1.1754944e-38, %v474
        %v476 = vsel %vm473, %v475, %v471
        %v477 = vmul.f32 %v412, %v476
        %v478 = vadd.f32 %v432, 1e-06
        %v479 = vadd.f32 %v447, 1e-06
        %v480 = vadd.f32 %v462, 1e-06
        %v481 = vadd.f32 %v477, 1e-06
        %v482 = vlog2.pop %v478
        %v483 = vmul.f32 %v482, 0.6931472
        %v484 = vlog2.pop %v479
        %v485 = vmul.f32 %v484, 0.6931472
        %v486 = vlog2.pop %v480
        %v487 = vmul.f32 %v486, 0.6931472
        %v488 = vlog2.pop %v481
        %v489 = vmul.f32 %v488, 0.6931472
        %v490 = vsub.f32 1.0, %v432
        %v491 = vsub.f32 1.0, %v447
        %v492 = vsub.f32 1.0, %v462
        %v493 = vsub.f32 1.0, %v477
        %v494 = vmul.f32 %v490, %v490
        %v495 = vmul.f32 %v491, %v491
        %v496 = vmul.f32 %v492, %v492
        %v497 = vmul.f32 %v493, %v493
        %v498 = vmul.f32 %v414, %v494
        %v499 = vmul.f32 %v415, %v495
        %v500 = vmul.f32 %v416, %v496
        %v501 = vmul.f32 %v417, %v497
        %v502 = vmul.f32 %v498, %v483
        %v503 = vmul.f32 %v499, %v485
        %v504 = vmul.f32 %v500, %v487
        %v505 = vmul.f32 %v501, %v489
        %v506 = vsub.f32 0.0, %v502
        %v507 = vsub.f32 0.0, %v503
        %v508 = vsub.f32 0.0, %v504
        %v509 = vsub.f32 0.0, %v505
        %v510 = vadd.f32 %v506, %v507
        %v511 = vadd.f32 %v510, %v508
        %v512 = vadd.f32 %v511, %v509
        %513 = vst [vmem:[%s264] sm:$0xff] %v512
        %s514 = sand.u32 %s123, 1
        %s515 = scalar_lea.sflag [#allocation4], %s514
        %s516 = sand.u32 %s123, 1
        %s517 = smul.addr %s516, 8
        %s518 = scalar_lea.vmem [#allocation9], %s517
        // Predicated region
        $region45: #{tpu_custom_call.1} parent=31 // pred_check
          %p519 = pneg %p133
        $region46: #{tpu_custom_call.1} parent=31 // pred_check_branch
          %521 = sbr.rel (%p519) target = $region48
        $region47: #{tpu_custom_call.1} parent=31 // pred_region
          %523 = vsyncadd %s515, 0
          %s524 = sadd.s32 %s29, %s28
          %s525 = smul.addr %s524, 8
          %s526 = scalar_lea.hbm %s3, %s525
          %s528 = sshll.u32 %s518, 4
          %s529 = int_to_ptr.vmem [resolvable:$true] %s528
          %s530 = sshll.u32 %s526, 4
          %s531 = int_to_ptr.hbm [resolvable:$true] %s530
          %533 = dma.vmem_to_hbm [thread:$0]  %s529, 128, %s531, %s515
        $region48: #{tpu_custom_call.1} parent=31 // pred_fallthru
          _
      $region32: #{tpu_custom_call.1} parent=5 // pred_fallthru
        _
      %p534 = scmp.le.s32.totalorder 2, %s19
      // Predicated region
      $region49: #{tpu_custom_call.1} parent=5 // pred_check
        %p535 = pneg %p534
      $region50: #{tpu_custom_call.1} parent=5 // pred_check_branch
        %537 = sbr.rel (%p535) target = $region52
      $region51: #{tpu_custom_call.1} parent=5 // pred_region
        %s538 = ssub.s32 %s19, 2
        // Predicated region
        $region53: #{tpu_custom_call.1} parent=51 // pred_check
          %p539 = pneg %p139
        $region54: #{tpu_custom_call.1} parent=51 // pred_check_branch
          %541 = sbr.rel (%p539) target = $region56
        $region55: #{tpu_custom_call.1} parent=51 // pred_region
          %s542 = sand.u32 %s124, 1
          %s543 = scalar_lea.sflag [#allocation4], %s542
          %s544 = sand.u32 %s124, 1
          %s545 = smul.addr %s544, 8
          %s546 = scalar_lea.vmem [#allocation9], %s545
          %548 = dma.done %s543, 128
        $region56: #{tpu_custom_call.1} parent=51 // pred_fallthru
          _
      $region52: #{tpu_custom_call.1} parent=5 // pred_fallthru
        _
    $region6: #{tpu_custom_call.1} parent=1 // loop_footer
      %s23 = sadd.s32 1, %s19
    $region7: #{tpu_custom_call.1} parent=1 // loop_footer_branch
      %18 = sbr.rel target = $region3
    $region8: #{tpu_custom_call.1} parent=1 // loop_exit
      _
    %549 = vsyncpa [#allocation3], 1
    %s550 = scalar_lea.sflag [#allocation3], 1
    %551 = vsyncpa %s550, 1
    %552 = vsyncpa [#allocation7], 1
    %s553 = scalar_lea.sflag [#allocation7], 1
    %554 = vsyncpa %s553, 1
    %555 = vsyncpa [#allocation4], 1
    %s556 = scalar_lea.sflag [#allocation4], 1
    %557 = vsyncpa %s556, 1
    %558 = vsyncpa [#allocation5], 1
    %s559 = scalar_lea.sflag [#allocation5], 1
    %560 = vsyncpa %s559, 1

</llo_original>
